<compile_context>
chip_gen: v6e
topology: v6e:2x2x1
jax: 0.10.0
libtpu: 0.0.40
codegen_flags: <defaults>
</compile_context>

<pallas_src>
import math
from functools import partial

import jax
import jax.numpy as jnp
from jax.experimental import pallas as pl
from jax.experimental.pallas import tpu as pltpu


def _scale_kernel(scale_ref, x_ref, o_ref):
    # scale_ref: (BN, 1) float32; x_ref / o_ref: (BN, TILE_F) in x's dtype.
    o_ref[...] = x_ref[...] * scale_ref[...].astype(o_ref.dtype)


_LANE = 128                      # TPU lane width
_TARGET_BLOCK_BYTES = 2 << 20    # ~2 MiB per block (~8 MiB live with double buffering)


def _pick_block(n: int, feat: int, itemsize: int):
    """Choose a (BN, TILE_F) block over the (N, FEAT) view of x.

    Legality rule: each of the last two block dims is either a multiple of the
    dtype-appropriate granule (sublane / lane) or equal to the full array dim.
    """
    gran = max(8, 32 // itemsize)          # f32 -> 8, bf16 -> 16, int8/fp8 -> 32
    budget_elems = max(_LANE, _TARGET_BLOCK_BYTES // itemsize)

    bn = n if n <= gran else gran

    tile_f = budget_elems // bn
    tile_f = max(_LANE, (tile_f // _LANE) * _LANE)
    if tile_f >= feat:
        # Whole sample fits in one block: take the full feature dim (always legal,
        # even when feat % 128 != 0) and pack more samples per block if possible.
        tile_f = feat
        if n > bn:
            bn_max = (budget_elems // max(feat, 1) // gran) * gran
            if bn_max >= n:
                bn = n
            elif bn_max > bn:
                bn = bn_max
    return bn, tile_f


@partial(jax.jit, static_argnames=("prob", "mode", "training"))
def stochastic_depth(x, seed, *, prob: float, mode: str, training: bool = True):
    """Pallas implementation of StochasticDepth.forward."""
    if prob == 0.0 or not training:
        return x

    survival = 1.0 - prob
    n = x.shape[0]
    feat = math.prod(x.shape[1:])

    # --- Bernoulli draw (hoisted out of the kernel) ---------------------------
    if survival <= 0.0:
        # prob >= 1.0: every sample dropped.  (PyTorch's bernoulli_(0).div_(0) would
        # produce NaNs; all-zeros is the sensible semantics.)
        return jnp.zeros_like(x)
    key = jax.random.PRNGKey(seed)
    n_draw = n if mode == "row" else 1
    keep = jax.random.bernoulli(key, p=survival, shape=(n_draw,))
    scale = keep.astype(jnp.float32) * jnp.float32(1.0 / survival)
    if mode != "row":
        scale = jnp.broadcast_to(scale, (n,))
    scale = scale.reshape(n, 1)

    # --- lane-dense 2-D view, no padding --------------------------------------
    itemsize = x.dtype.itemsize
    bn, tile_f = _pick_block(n, feat, itemsize)
    xf = x.reshape(n, feat)

    grid = (pl.cdiv(n, bn), pl.cdiv(feat, tile_f))
    out = pl.pallas_call(
        _scale_kernel,
        out_shape=jax.ShapeDtypeStruct((n, feat), x.dtype),
        grid_spec=pltpu.PrefetchScalarGridSpec(
            num_scalar_prefetch=0,
            grid=grid,
            in_specs=[
                pl.BlockSpec((bn, 1), lambda i, j: (i, 0)),
                pl.BlockSpec((bn, tile_f), lambda i, j: (i, j)),
            ],
            out_specs=pl.BlockSpec((bn, tile_f), lambda i, j: (i, j)),
        ),
        compiler_params=pltpu.CompilerParams(
            # Blocks are fully independent -> shard grid across TensorCores (v7x).
            dimension_semantics=("parallel", "parallel"),
        ),
    )(scale, xf)

    return out.reshape(x.shape)


def _reference(x, seed, prob, mode):
    """Pure-JAX reference with the same RNG draw as the kernel wrapper."""
    survival = 1.0 - prob
    key = jax.random.PRNGKey(seed)
    n_draw = x.shape[0] if mode == "row" else 1
    keep = jax.random.bernoulli(key, p=survival, shape=(n_draw,)).astype(jnp.float32)
    scale = keep / jnp.float32(survival)
    shape = (x.shape[0],) + (1,) * (x.ndim - 1) if mode == "row" else (1,) * x.ndim
    return (x * scale.reshape(shape)).astype(x.dtype)


if __name__ == "__main__":
    key = jax.random.PRNGKey(0)
    x = jax.random.normal(key, (2, 4, 16, 16), dtype=jnp.float32)

    # training mode, 'row' stochastic depth (per-sample mask)
    y_row = stochastic_depth(x, 1234, prob=0.2, mode="row", training=True)
    y_row = jax.block_until_ready(y_row)
    assert jnp.allclose(y_row, _reference(x, 1234, 0.2, "row"), rtol=1e-6, atol=1e-6)

    # 'batch' mode (single scalar mask for the whole tensor)
    y_batch = stochastic_depth(x, 42, prob=0.2, mode="batch", training=True)
    y_batch = jax.block_until_ready(y_batch)
    assert jnp.allclose(y_batch, _reference(x, 42, 0.2, "batch"), rtol=1e-6, atol=1e-6)

    # eval mode -> identity (matches the PyTorch early-return branch)
    y_eval = stochastic_depth(x, 1234, prob=0.2, mode="row", training=False)
    y_eval = jax.block_until_ready(y_eval)
    assert jnp.allclose(y_eval, x)

    # feature dim not a multiple of 128 -> exercises the full-dim / masked-edge path
    x2 = jax.random.normal(jax.random.PRNGKey(7), (4, 3, 10, 10), dtype=jnp.float32)
    y2 = stochastic_depth(x2, 99, prob=0.25, mode="row", training=True)
    y2 = jax.block_until_ready(y2)
    assert jnp.allclose(y2, _reference(x2, 99, 0.25, "row"), rtol=1e-6, atol=1e-6)

    # batch > sublane granule -> exercises multi-sample block packing
    x3 = jax.random.normal(jax.random.PRNGKey(3), (16, 4, 16, 16), dtype=jnp.float32)
    y3 = stochastic_depth(x3, 5, prob=0.5, mode="row", training=True)
    y3 = jax.block_until_ready(y3)
    assert jnp.allclose(y3, _reference(x3, 5, 0.5, "row"), rtol=1e-6, atol=1e-6)

    # 'row' semantics sanity check: each sample is either dropped or scaled by 1/survival.
    survival = 0.8
    for i in range(x.shape[0]):
        row = y_row[i]
        ok_zero = bool(jnp.allclose(row, 0.0))
        ok_scaled = bool(jnp.allclose(row, x[i] / survival, rtol=1e-5, atol=1e-5))
        assert ok_zero or ok_scaled, f"sample {i} neither dropped nor scaled"

    print("KERNEL_OK")
</pallas_src>

<mosaic_0001>
module attributes {stable_mosaic.version = 11 : i64} {
  func.func @_scale_kernel(%arg0: i32, %arg1: i32, %arg2: memref<2x1xf32, #tpu.memory_space<vmem>>, %arg3: memref<2x1024xf32, #tpu.memory_space<vmem>>, %arg4: memref<2x1024xf32, #tpu.memory_space<vmem>>) attributes {dimension_semantics = [#tpu.dimension_semantics<parallel>, #tpu.dimension_semantics<parallel>], iteration_bounds = array<i64: 1, 1>, scalar_prefetch = 0 : i64, scratch_operands = 0 : i64, tpu.core_type = #tpu.core_type<tc>, window_params = [{transform_indices = @transform_0, window_bounds = array<i64: 2, 1>}, {transform_indices = @transform_1, window_bounds = array<i64: 2, 1024>}, {transform_indices = @transform_2, window_bounds = array<i64: 2, 1024>}]} {
    %c0 = arith.constant 0 : index
    %c0_0 = arith.constant 0 : index
    %0 = vector.load %arg3[%c0, %c0_0] : memref<2x1024xf32, #tpu.memory_space<vmem>>, vector<2x1024xf32>
    %c0_1 = arith.constant 0 : index
    %c0_2 = arith.constant 0 : index
    %1 = vector.load %arg2[%c0_1, %c0_2] : memref<2x1xf32, #tpu.memory_space<vmem>>, vector<2x1xf32>
    %2 = vector.broadcast %1 : vector<2x1xf32> to vector<2x1024xf32>
    %3 = arith.mulf %0, %2 : vector<2x1024xf32>
    %c0_3 = arith.constant 0 : index
    %c0_4 = arith.constant 0 : index
    %4 = vector.load %arg4[%c0_3, %c0_4] : memref<2x1024xf32, #tpu.memory_space<vmem>>, vector<2x1024xf32>
    tpu.vector_store %arg4[%c0_3, %c0_4], %3 {strides = array<i32>} : memref<2x1024xf32, #tpu.memory_space<vmem>>, vector<2x1024xf32>,
    return
  }
  func.func @transform_0(%arg0: i32, %arg1: i32) -> (i32, i32) {
    %c0_i32 = arith.constant 0 : i32
    %c0_i32_0 = arith.constant 0 : i32
    return %arg0, %c0_i32 : i32, i32
  }
  func.func @transform_1(%arg0: i32, %arg1: i32) -> (i32, i32) {
    %c0_i32 = arith.constant 0 : i32
    return %arg0, %arg1 : i32, i32
  }
  func.func @transform_2(%arg0: i32, %arg1: i32) -> (i32, i32) {
    %c0_i32 = arith.constant 0 : i32
    return %arg0, %arg1 : i32, i32
  }
}

</mosaic_0001>

<llo_original>
// kernel: stochastic_depth.1
$region0: #{stochastic_depth.1}
  #allocation0 [shape = 'u32[]', space=smem, size = 0x4, offset = 0x4, fixed_abs, tag = 'smem constant byte address 0x4 - core index']
  #allocation1 [shape = 'u32[144,128]{1,0:T(1,128)}', space=vmem, size = 0x12000, scoped, tag = 'internal scratch']
  %s0 = inlined_call_operand.vmem [shape: f32[2,1], index: 0, kind: input, shape index: {}]
  %s1 = inlined_call_operand.vmem [shape: f32[2,1024], index: 1, kind: input, shape index: {}]
  %s2 = inlined_call_operand.vmem [shape: f32[2,1024], index: 2, kind: output, shape index: {}]
  %s3 = sld [smem:[#allocation0]]
  $region18: #{stochastic_depth.1} parent=0
    _
  %s5 = ssub.s32 1, %s3
  %s6 = scalar_select 0, %s5, %s3
  // Predicated region
  $region2: #{stochastic_depth.1} parent=0 // pred_check
    _
  $region3: #{stochastic_depth.1} parent=0 // pred_check_branch
    %8 = sbr.rel (0) target = $region5
  $region4: #{stochastic_depth.1} parent=0 // pred_region
    _
  $region5: #{stochastic_depth.1} parent=0 // pred_fallthru
    _
  // Predicated region
  $region6: #{stochastic_depth.1} parent=0 // pred_check
    _
  $region7: #{stochastic_depth.1} parent=0 // pred_check_branch
    %10 = sbr.rel (0) target = $region9
  $region8: #{stochastic_depth.1} parent=0 // pred_region
    _
  $region9: #{stochastic_depth.1} parent=0 // pred_fallthru
    _
  %v11 = vld [vmem:[%s1] sm:$0xff]
  %v12 = vld [vmem:[%s1 + $0x8] sm:$0xff]
  %v13 = vld [vmem:[%s0] sm:$0x3]
  %15 = vset.pattern.permute.xlu0 0
  %16 = vperm.xlu0 %15, %v13
  %v17 = vpop.permute.xlu0 %16
  %v19 = vunpack.c.l.s4 269488144
  %v20 = vunpack.c.0.s8 %v19
  %v21 = vlaneseq
  %v22 = vshrl.u32 %v21, 7
  %v23 = vsub.s32 %v20, %v22
  %v24 = vrot.slane %v17, %v23
  %v26 = vmul.f32 %v11, %v24
  %v27 = vmul.f32 %v12, %v24
  %28 = vst [vmem:[%s2] sm:$0xff] %v26
  %29 = vst [vmem:[%s2 + $0x8] sm:$0xff] %v27
  // Predicated region
  $region10: #{stochastic_depth.1} parent=0 // pred_check
    _
  $region11: #{stochastic_depth.1} parent=0 // pred_check_branch
    %31 = sbr.rel (0) target = $region13
  $region12: #{stochastic_depth.1} parent=0 // pred_region
    _
  $region13: #{stochastic_depth.1} parent=0 // pred_fallthru
    _
  // Predicated region
  $region14: #{stochastic_depth.1} parent=0 // pred_check
    _
  $region15: #{stochastic_depth.1} parent=0 // pred_check_branch
    %33 = sbr.rel (0) target = $region17
  $region16: #{stochastic_depth.1} parent=0 // pred_region
    _
  $region17: #{stochastic_depth.1} parent=0 // pred_fallthru
    _

</llo_original>
